<compile_context>
chip_gen: v7x
topology: tpu7x:2x2x1
jax: 0.10.0
libtpu: 0.0.40
codegen_flags: <defaults>
</compile_context>

<pallas_src>
import jax
import jax.numpy as jnp
from jax.experimental import pallas as pl
from jax.experimental.pallas import tpu as pltpu

H1, H2, H3 = 64, 128, 256   # hidden sizes from the module definition
H1_PAD = 128                # fc1 output width padded to a full lane group
MAX_BATCH_TILE = 1024       # multiple of 8/128/256; amortizes per-step overhead
SMALL_BATCH = 64            # at/below this, a single grid step (splitting costs more)


def _cdiv(a, b):
    return -(-a // b)


def _round_up(x, m):
    return ((x + m - 1) // m) * m


def _actor_cont_kernel(x_ref,
                       w1_ref, b1_ref,
                       w2_ref, b2_ref,
                       w3_ref, b3_ref,
                       w4_ref, b4_ref,
                       o_ref):
    """Whole 4-layer MLP for one batch tile. Weights stay VMEM-resident
    (constant index_map => the same blocks are reused every grid step)."""
    cdt = w1_ref.dtype  # matmul-input dtype (bf16 on the fast path)

    x = x_ref[...].astype(cdt)  # no-op if the caller already supplies bf16
    h = jnp.dot(x, w1_ref[...], preferred_element_type=jnp.float32) + b1_ref[...]
    h = jnp.maximum(h, 0.0)

    h = jnp.dot(h.astype(cdt), w2_ref[...],
                preferred_element_type=jnp.float32) + b2_ref[...]
    h = jnp.maximum(h, 0.0)

    h = jnp.dot(h.astype(cdt), w3_ref[...],
                preferred_element_type=jnp.float32) + b3_ref[...]
    h = jnp.maximum(h, 0.0)

    # dropout(p=0.1): identity in eval mode.

    out = jnp.dot(h.astype(cdt), w4_ref[...],
                  preferred_element_type=jnp.float32) + b4_ref[...]
    o_ref[...] = out.astype(o_ref.dtype)


def prepare_params(params, mm_dtype=jnp.bfloat16):
    """One-time parameter preparation. Run ONCE, outside the forward:
      * pad fc1's output width 64 -> 128 with zero columns (and fc2's input
        rows to match): lane-dense h1, K=128 for fc2, exact numerics.
      * cast weights to the matmul dtype (bf16 MXU inputs); biases stay f32
        so bias-add + ReLU execute as f32 VPU ops."""
    w1 = jnp.pad(params["w1"], ((0, 0), (0, H1_PAD - H1)))
    b1 = jnp.pad(params["b1"], ((0, 0), (0, H1_PAD - H1)))
    w2 = jnp.pad(params["w2"], ((0, H1_PAD - H1), (0, 0)))
    return {
        "w1": w1.astype(mm_dtype),            "b1": b1.astype(jnp.float32),
        "w2": w2.astype(mm_dtype),            "b2": params["b2"].astype(jnp.float32),
        "w3": params["w3"].astype(mm_dtype),  "b3": params["b3"].astype(jnp.float32),
        "w4": params["w4"].astype(mm_dtype),  "b4": params["b4"].astype(jnp.float32),
    }


@jax.jit
def actor_cont_forward(x, prepped):
    """x: [B, input_dim] (f32 or bf16). prepped: output of prepare_params()."""
    w1, b1 = prepped["w1"], prepped["b1"]
    w2, b2 = prepped["w2"], prepped["b2"]
    w3, b3 = prepped["w3"], prepped["b3"]
    w4, b4 = prepped["w4"], prepped["b4"]

    B, in_dim = x.shape
    out_dim = w4.shape[1]

    # Batch tiling:
    #   * tiny batches: one full-array block (full-dim block is always legal).
    #   * otherwise: >=2 grid steps (v7x has 2 TensorCores; "parallel" only
    #     shards across them with >=2 steps), capped at MAX_BATCH_TILE rows.
    if B <= SMALL_BATCH:
        tile = B
    else:
        tile = min(MAX_BATCH_TILE, _round_up(_cdiv(B, 2), 8))
    grid = (_cdiv(B, tile),)

    # Advisory cost hint for XLA's scheduler around the custom call.
    flops = 2 * B * (in_dim * w1.shape[1]
                     + w2.shape[0] * w2.shape[1]
                     + w3.shape[0] * w3.shape[1]
                     + w4.shape[0] * out_dim)
    bytes_accessed = (
        x.size * x.dtype.itemsize
        + sum(a.size * a.dtype.itemsize for a in (w1, b1, w2, b2, w3, b3, w4, b4))
        + B * out_dim * 4
    )

    def _full2d(arr):
        # Constant block index -> weights/biases stay resident in VMEM.
        return pl.BlockSpec(arr.shape, lambda i: (0, 0))

    out = pl.pallas_call(
        _actor_cont_kernel,
        out_shape=jax.ShapeDtypeStruct((B, out_dim), jnp.float32),
        grid_spec=pltpu.PrefetchScalarGridSpec(
            num_scalar_prefetch=0,
            grid=grid,
            in_specs=[
                pl.BlockSpec((tile, in_dim), lambda i: (i, 0)),
                _full2d(w1), _full2d(b1),
                _full2d(w2), _full2d(b2),
                _full2d(w3), _full2d(b3),
                _full2d(w4), _full2d(b4),
            ],
            out_specs=pl.BlockSpec((tile, out_dim), lambda i: (i, 0)),
        ),
        compiler_params=pltpu.CompilerParams(
            dimension_semantics=("parallel",),
        ),
        cost_estimate=pl.CostEstimate(
            flops=flops, transcendentals=0, bytes_accessed=bytes_accessed),
    )(x, w1, b1, w2, b2, w3, b3, w4, b4)

    return out


def init_params(key, input_dim, output_dim):
    """Deterministic synthetic init (PyTorch-style uniform fan-in bound)."""
    dims = [(input_dim, H1), (H1, H2), (H2, H3), (H3, output_dim)]
    params = {}
    keys = jax.random.split(key, 2 * len(dims))
    for idx, (fan_in, fan_out) in enumerate(dims):
        bound = 1.0 / jnp.sqrt(jnp.float32(fan_in))
        w = jax.random.uniform(keys[2 * idx], (fan_in, fan_out),
                               dtype=jnp.float32, minval=-bound, maxval=bound)
        b = jax.random.uniform(keys[2 * idx + 1], (1, fan_out),
                               dtype=jnp.float32, minval=-bound, maxval=bound)
        params[f"w{idx + 1}"] = w
        params[f"b{idx + 1}"] = b
    return params


def reference_forward(x, params):
    """Pure-JAX reference on the ORIGINAL (unpadded f32) params, mirroring the
    kernel's bf16-matmul/f32-accumulate numerics (dropout = identity)."""
    mm = jnp.bfloat16

    def layer(h, w, b):
        return jnp.dot(h.astype(mm), w.astype(mm),
                       preferred_element_type=jnp.float32) + b

    h = jax.nn.relu(layer(x, params["w1"], params["b1"]))
    h = jax.nn.relu(layer(h, params["w2"], params["b2"]))
    h = jax.nn.relu(layer(h, params["w3"], params["b3"]))
    return layer(h, params["w4"], params["b4"])


if __name__ == "__main__":
    key = jax.random.PRNGKey(0)
    k_param, k_x, k_x2 = jax.random.split(key, 3)

    batch, input_dim, output_dim = 2, 16, 8
    params = init_params(k_param, input_dim, output_dim)
    prepped = prepare_params(params)   # one-time: pad H1, cast weights to bf16

    # Small-batch case (single full-array tile).
    x = jax.random.normal(k_x, (batch, input_dim), dtype=jnp.float32)
    y = jax.block_until_ready(actor_cont_forward(x, prepped))
    y_ref = reference_forward(x, params)
    assert y.shape == (batch, output_dim)
    assert jnp.allclose(y, y_ref, atol=1e-3, rtol=1e-3), "mismatch vs reference (small)"

    # Larger ragged-batch case (exercises 2-way split + masked last tile).
    x2 = jax.random.normal(k_x2, (300, input_dim), dtype=jnp.float32)
    y2 = jax.block_until_ready(actor_cont_forward(x2, prepped))
    y2_ref = reference_forward(x2, params)
    assert y2.shape == (300, output_dim)
    assert jnp.allclose(y2, y2_ref, atol=1e-3, rtol=1e-3), "mismatch vs reference (large)"

    print("KERNEL_OK")
</pallas_src>

<mosaic_0001>
module attributes {stable_mosaic.version = 11 : i64} {
  func.func @_actor_cont_kernel(%arg0: i32, %arg1: memref<2x16xf32, #tpu.memory_space<vmem>>, %arg2: memref<16x128xbf16, #tpu.memory_space<vmem>>, %arg3: memref<1x128xf32, #tpu.memory_space<vmem>>, %arg4: memref<128x128xbf16, #tpu.memory_space<vmem>>, %arg5: memref<1x128xf32, #tpu.memory_space<vmem>>, %arg6: memref<128x256xbf16, #tpu.memory_space<vmem>>, %arg7: memref<1x256xf32, #tpu.memory_space<vmem>>, %arg8: memref<256x8xbf16, #tpu.memory_space<vmem>>, %arg9: memref<1x8xf32, #tpu.memory_space<vmem>>, %arg10: memref<2x8xf32, #tpu.memory_space<vmem>>) attributes {dimension_semantics = [#tpu.dimension_semantics<parallel>], iteration_bounds = array<i64: 1>, scalar_prefetch = 0 : i64, scratch_operands = 0 : i64, tpu.core_type = #tpu.core_type<tc>, window_params = [{transform_indices = @transform_0, window_bounds = array<i64: 2, 16>}, {pipeline_mode = #tpu.pipeline_mode<synchronous>, transform_indices = @transform_1, window_bounds = array<i64: 16, 128>}, {pipeline_mode = #tpu.pipeline_mode<synchronous>, transform_indices = @transform_2, window_bounds = array<i64: 1, 128>}, {pipeline_mode = #tpu.pipeline_mode<synchronous>, transform_indices = @transform_3, window_bounds = array<i64: 128, 128>}, {pipeline_mode = #tpu.pipeline_mode<synchronous>, transform_indices = @transform_4, window_bounds = array<i64: 1, 128>}, {pipeline_mode = #tpu.pipeline_mode<synchronous>, transform_indices = @transform_5, window_bounds = array<i64: 128, 256>}, {pipeline_mode = #tpu.pipeline_mode<synchronous>, transform_indices = @transform_6, window_bounds = array<i64: 1, 256>}, {pipeline_mode = #tpu.pipeline_mode<synchronous>, transform_indices = @transform_7, window_bounds = array<i64: 256, 8>}, {pipeline_mode = #tpu.pipeline_mode<synchronous>, transform_indices = @transform_8, window_bounds = array<i64: 1, 8>}, {transform_indices = @transform_9, window_bounds = array<i64: 2, 8>}]} {
    %c0 = arith.constant 0 : index
    %c0_0 = arith.constant 0 : index
    %0 = vector.load %arg1[%c0, %c0_0] : memref<2x16xf32, #tpu.memory_space<vmem>>, vector<2x16xf32>
    %1 = arith.truncf %0 : vector<2x16xf32> to vector<2x16xbf16>
    %c0_1 = arith.constant 0 : index
    %c0_2 = arith.constant 0 : index
    %2 = vector.load %arg2[%c0_1, %c0_2] : memref<16x128xbf16, #tpu.memory_space<vmem>>, vector<16x128xbf16>
    %cst = arith.constant dense<0.000000e+00> : vector<2x128xf32>
    %3 = tpu.matmul %1, %2, %cst {dimension_numbers = #tpu.dot_dimension_numbers<[1], [0], [0], [1], [0, 0, 1, 1], [], []>} : vector<2x16xbf16>, vector<16x128xbf16>, vector<2x128xf32> -> vector<2x128xf32>
    %c0_3 = arith.constant 0 : index
    %c0_4 = arith.constant 0 : index
    %4 = vector.load %arg3[%c0_3, %c0_4] : memref<1x128xf32, #tpu.memory_space<vmem>>, vector<1x128xf32>
    %5 = vector.broadcast %4 : vector<1x128xf32> to vector<2x128xf32>
    %6 = arith.addf %3, %5 : vector<2x128xf32>
    %cst_5 = arith.constant 0.000000e+00 : f32
    %7 = vector.broadcast %cst_5 : f32 to vector<2x128xf32>
    %8 = arith.maximumf %6, %7 : vector<2x128xf32>
    %9 = arith.truncf %8 : vector<2x128xf32> to vector<2x128xbf16>
    %c0_6 = arith.constant 0 : index
    %c0_7 = arith.constant 0 : index
    %10 = vector.load %arg4[%c0_6, %c0_7] : memref<128x128xbf16, #tpu.memory_space<vmem>>, vector<128x128xbf16>
    %cst_8 = arith.constant dense<0.000000e+00> : vector<2x128xf32>
    %11 = tpu.matmul %9, %10, %cst_8 {dimension_numbers = #tpu.dot_dimension_numbers<[1], [0], [0], [1], [0, 0, 1, 1], [], []>} : vector<2x128xbf16>, vector<128x128xbf16>, vector<2x128xf32> -> vector<2x128xf32>
    %c0_9 = arith.constant 0 : index
    %c0_10 = arith.constant 0 : index
    %12 = vector.load %arg5[%c0_9, %c0_10] : memref<1x128xf32, #tpu.memory_space<vmem>>, vector<1x128xf32>
    %13 = vector.broadcast %12 : vector<1x128xf32> to vector<2x128xf32>
    %14 = arith.addf %11, %13 : vector<2x128xf32>
    %cst_11 = arith.constant 0.000000e+00 : f32
    %15 = vector.broadcast %cst_11 : f32 to vector<2x128xf32>
    %16 = arith.maximumf %14, %15 : vector<2x128xf32>
    %17 = arith.truncf %16 : vector<2x128xf32> to vector<2x128xbf16>
    %c0_12 = arith.constant 0 : index
    %c0_13 = arith.constant 0 : index
    %18 = vector.load %arg6[%c0_12, %c0_13] : memref<128x256xbf16, #tpu.memory_space<vmem>>, vector<128x256xbf16>
    %cst_14 = arith.constant dense<0.000000e+00> : vector<2x256xf32>
    %19 = tpu.matmul %17, %18, %cst_14 {dimension_numbers = #tpu.dot_dimension_numbers<[1], [0], [0], [1], [0, 0, 1, 1], [], []>} : vector<2x128xbf16>, vector<128x256xbf16>, vector<2x256xf32> -> vector<2x256xf32>
    %c0_15 = arith.constant 0 : index
    %c0_16 = arith.constant 0 : index
    %20 = vector.load %arg7[%c0_15, %c0_16] : memref<1x256xf32, #tpu.memory_space<vmem>>, vector<1x256xf32>
    %21 = vector.broadcast %20 : vector<1x256xf32> to vector<2x256xf32>
    %22 = arith.addf %19, %21 : vector<2x256xf32>
    %cst_17 = arith.constant 0.000000e+00 : f32
    %23 = vector.broadcast %cst_17 : f32 to vector<2x256xf32>
    %24 = arith.maximumf %22, %23 : vector<2x256xf32>
    %25 = arith.truncf %24 : vector<2x256xf32> to vector<2x256xbf16>
    %c0_18 = arith.constant 0 : index
    %c0_19 = arith.constant 0 : index
    %26 = vector.load %arg8[%c0_18, %c0_19] : memref<256x8xbf16, #tpu.memory_space<vmem>>, vector<256x8xbf16>
    %cst_20 = arith.constant dense<0.000000e+00> : vector<2x8xf32>
    %27 = tpu.matmul %25, %26, %cst_20 {dimension_numbers = #tpu.dot_dimension_numbers<[1], [0], [0], [1], [0, 0, 1, 1], [], []>} : vector<2x256xbf16>, vector<256x8xbf16>, vector<2x8xf32> -> vector<2x8xf32>
    %c0_21 = arith.constant 0 : index
    %c0_22 = arith.constant 0 : index
    %28 = vector.load %arg9[%c0_21, %c0_22] : memref<1x8xf32, #tpu.memory_space<vmem>>, vector<1x8xf32>
    %29 = vector.broadcast %28 : vector<1x8xf32> to vector<2x8xf32>
    %30 = arith.addf %27, %29 : vector<2x8xf32>
    %c0_23 = arith.constant 0 : index
    %c0_24 = arith.constant 0 : index
    %31 = vector.load %arg10[%c0_23, %c0_24] : memref<2x8xf32, #tpu.memory_space<vmem>>, vector<2x8xf32>
    tpu.vector_store %arg10[%c0_23, %c0_24], %30 {strides = array<i32>} : memref<2x8xf32, #tpu.memory_space<vmem>>, vector<2x8xf32>,
    return
  }
  func.func @transform_0(%arg0: i32) -> (i32, i32) {
    %c0_i32 = arith.constant 0 : i32
    %c0_i32_0 = arith.constant 0 : i32
    return %arg0, %c0_i32 : i32, i32
  }
  func.func @transform_1(%arg0: i32) -> (i32, i32) {
    %c0_i32 = arith.constant 0 : i32
    %c0_i32_0 = arith.constant 0 : i32
    %c0_i32_1 = arith.constant 0 : i32
    return %c0_i32, %c0_i32_0 : i32, i32
  }
  func.func @transform_2(%arg0: i32) -> (i32, i32) {
    %c0_i32 = arith.constant 0 : i32
    %c0_i32_0 = arith.constant 0 : i32
    %c0_i32_1 = arith.constant 0 : i32
    return %c0_i32, %c0_i32_0 : i32, i32
  }
  func.func @transform_3(%arg0: i32) -> (i32, i32) {
    %c0_i32 = arith.constant 0 : i32
    %c0_i32_0 = arith.constant 0 : i32
    %c0_i32_1 = arith.constant 0 : i32
    return %c0_i32, %c0_i32_0 : i32, i32
  }
  func.func @transform_4(%arg0: i32) -> (i32, i32) {
    %c0_i32 = arith.constant 0 : i32
    %c0_i32_0 = arith.constant 0 : i32
    %c0_i32_1 = arith.constant 0 : i32
    return %c0_i32, %c0_i32_0 : i32, i32
  }
  func.func @transform_5(%arg0: i32) -> (i32, i32) {
    %c0_i32 = arith.constant 0 : i32
    %c0_i32_0 = arith.constant 0 : i32
    %c0_i32_1 = arith.constant 0 : i32
    return %c0_i32, %c0_i32_0 : i32, i32
  }
  func.func @transform_6(%arg0: i32) -> (i32, i32) {
    %c0_i32 = arith.constant 0 : i32
    %c0_i32_0 = arith.constant 0 : i32
    %c0_i32_1 = arith.constant 0 : i32
    return %c0_i32, %c0_i32_0 : i32, i32
  }
  func.func @transform_7(%arg0: i32) -> (i32, i32) {
    %c0_i32 = arith.constant 0 : i32
    %c0_i32_0 = arith.constant 0 : i32
    %c0_i32_1 = arith.constant 0 : i32
    return %c0_i32, %c0_i32_0 : i32, i32
  }
  func.func @transform_8(%arg0: i32) -> (i32, i32) {
    %c0_i32 = arith.constant 0 : i32
    %c0_i32_0 = arith.constant 0 : i32
    %c0_i32_1 = arith.constant 0 : i32
    return %c0_i32, %c0_i32_0 : i32, i32
  }
  func.func @transform_9(%arg0: i32) -> (i32, i32) {
    %c0_i32 = arith.constant 0 : i32
    %c0_i32_0 = arith.constant 0 : i32
    return %arg0, %c0_i32 : i32, i32
  }
}

</mosaic_0001>

<llo_original>
// kernel: actor_cont_forward.1
$region0: #{actor_cont_forward.1}
  #allocation0 [shape = 'u32[]', space=smem, size = 0x4, offset = 0x4, fixed_abs, tag = 'smem constant byte address 0x4 - core index']
  #allocation1 [shape = 'u32[144,128]{1,0:T(1,128)}', space=vmem, size = 0x12000, scoped, tag = 'internal scratch']
  %s0 = inlined_call_operand.vmem [shape: f32[2,16], index: 0, kind: input, shape index: {}]
  %s1 = inlined_call_operand.vmem [shape: bf16[16,128], index: 1, kind: input, shape index: {}]
  %s2 = inlined_call_operand.vmem [shape: f32[1,128], index: 2, kind: input, shape index: {}]
  %s3 = inlined_call_operand.hbm [shape: bf16[128,128], index: 3, kind: input, shape index: {}]
  %s4 = inlined_call_operand.vmem [shape: f32[1,128], index: 4, kind: input, shape index: {}]
  %s5 = inlined_call_operand.vmem [shape: bf16[128,256], index: 5, kind: input, shape index: {}]
  %s6 = inlined_call_operand.vmem [shape: f32[1,256], index: 6, kind: input, shape index: {}]
  %s7 = inlined_call_operand.vmem [shape: bf16[256,8], index: 7, kind: input, shape index: {}]
  %s8 = inlined_call_operand.vmem [shape: f32[1,8], index: 8, kind: input, shape index: {}]
  %s9 = inlined_call_operand.hbm [shape: f32[2,8], index: 9, kind: output, shape index: {}]
  %s10 = sld [smem:[#allocation0]]
  $region50: #{actor_cont_forward.1} parent=0
    _
  %s12 = ssub.s32 1, %s10
  %s13 = scalar_select 0, %s12, %s10
  $region1: #{actor_cont_forward.1} parent=0
    #allocation2 [shape = 'u8[32768]{0}', space=vmem, size = 0x8000, scoped, tag = 'input window, operand 3, single buffered']
    #allocation3 [shape = 's32[1]{0}', space=sflag, size = 0x4, scoped, tag = 'scoped memory for actor_cont_forward.1']
    #allocation4 [shape = 's32[1]{0}', space=sflag, size = 0x4, scoped, tag = 'scoped memory for actor_cont_forward.1']
    #allocation5 [shape = 'u8[1024]{0}', space=vmem, size = 0x400, scoped, tag = 'output window, operand 0, single buffered']
    %14 = vsyncpa [#allocation3], 0
    %15 = vsyncpa [#allocation4], 0
    // Predicated region
    $region2: #{actor_cont_forward.1} parent=1 // pred_check
      _
    $region3: #{actor_cont_forward.1} parent=1 // pred_check_branch
      %17 = sbr.rel (0) target = $region5
    $region4: #{actor_cont_forward.1} parent=1 // pred_region
      _
    $region5: #{actor_cont_forward.1} parent=1 // pred_fallthru
      _
    // Predicated region
    $region6: #{actor_cont_forward.1} parent=1 // pred_check
      _
    $region7: #{actor_cont_forward.1} parent=1 // pred_check_branch
      %19 = sbr.rel (0) target = $region9
    $region8: #{actor_cont_forward.1} parent=1 // pred_region
      _
    $region9: #{actor_cont_forward.1} parent=1 // pred_fallthru
      _
    // Predicated region
    $region10: #{actor_cont_forward.1} parent=1 // pred_check
      _
    $region11: #{actor_cont_forward.1} parent=1 // pred_check_branch
      %21 = sbr.rel (0) target = $region13
    $region12: #{actor_cont_forward.1} parent=1 // pred_region
      _
    $region13: #{actor_cont_forward.1} parent=1 // pred_fallthru
      _
    // Predicated region
    $region14: #{actor_cont_forward.1} parent=1 // pred_check
      _
    $region15: #{actor_cont_forward.1} parent=1 // pred_check_branch
      %23 = sbr.rel (0) target = $region17
    $region16: #{actor_cont_forward.1} parent=1 // pred_region
      %s25 = ssub.s32 1024, 1024
      %26 = vsyncadd [#allocation3], %s25
      %s27 = sshll.u32 [#allocation2], 4
      %s28 = int_to_ptr.vmem [resolvable:$true] %s27
      %33 = dma.hbm_to_vmem [thread:$0]  %s3, 1024, %s28, [#allocation3], 64, 64, 4
    $region17: #{actor_cont_forward.1} parent=1 // pred_fallthru
      _
    // Predicated region
    $region18: #{actor_cont_forward.1} parent=1 // pred_check
      _
    $region19: #{actor_cont_forward.1} parent=1 // pred_check_branch
      %35 = sbr.rel (0) target = $region21
    $region20: #{actor_cont_forward.1} parent=1 // pred_region
      _
    $region21: #{actor_cont_forward.1} parent=1 // pred_fallthru
      _
    // Predicated region
    $region22: #{actor_cont_forward.1} parent=1 // pred_check
      _
    $region23: #{actor_cont_forward.1} parent=1 // pred_check_branch
      %37 = sbr.rel (0) target = $region25
    $region24: #{actor_cont_forward.1} parent=1 // pred_region
      _
    $region25: #{actor_cont_forward.1} parent=1 // pred_fallthru
      _
    // Predicated region
    $region26: #{actor_cont_forward.1} parent=1 // pred_check
      _
    $region27: #{actor_cont_forward.1} parent=1 // pred_check_branch
      %39 = sbr.rel (0) target = $region29
    $region28: #{actor_cont_forward.1} parent=1 // pred_region
      _
    $region29: #{actor_cont_forward.1} parent=1 // pred_fallthru
      _
    // Predicated region
    $region30: #{actor_cont_forward.1} parent=1 // pred_check
      _
    $region31: #{actor_cont_forward.1} parent=1 // pred_check_branch
      %41 = sbr.rel (0) target = $region33
    $region32: #{actor_cont_forward.1} parent=1 // pred_region
      _
    $region33: #{actor_cont_forward.1} parent=1 // pred_fallthru
      _
    // Predicated region
    $region34: #{actor_cont_forward.1} parent=1 // pred_check
      _
    $region35: #{actor_cont_forward.1} parent=1 // pred_check_branch
      %43 = sbr.rel (0) target = $region37
    $region36: #{actor_cont_forward.1} parent=1 // pred_region
      _
    $region37: #{actor_cont_forward.1} parent=1 // pred_fallthru
      _
    // Predicated region
    $region38: #{actor_cont_forward.1} parent=1 // pred_check
      _
    $region39: #{actor_cont_forward.1} parent=1 // pred_check_branch
      %45 = sbr.rel (0) target = $region41
    $region40: #{actor_cont_forward.1} parent=1 // pred_region
      %46 = dma.done [#allocation3], 1024
    $region41: #{actor_cont_forward.1} parent=1 // pred_fallthru
      _
    %v48 = vld [vmem:[%s0] sm:$0x3]
    %v49 = vpack.c.bf16 %v48, %v48
    %v50 = vld [vmem:[%s1] sm:$0xf]
    %v51 = vld [vmem:[%s1 + $0x4] sm:$0xf]
    %v52 = vld [vmem:[%s2] sm:$0x1]
    %v54 = vlaneseq
    %v55 = vshrl.u32 %v54, 7
    %v56 = vsub.s32 0, %v55
    %v57 = vrot.slane %v52, %v56
    %v61 = vunpack.c.l.b16 %v50
    %v62 = vunpack.c.l.b16 %v51
    %v63 = vpack.c.b16 %v62, %v61
    %vm65 = vcmask 130048
    %v67 = vsel %vm65, %v49, 0
    %69 = vmatprep.subr.bf16.mxu0 0
    %70 = vmatpush1.bf16.msra.mxu0 %v63
    %71 = vmatprep.subr.bf16.mxu0 0
    %72 = vmatpush1.bf16.msra.mxu0 0
    %73 = vmatprep.subr.bf16.mxu0 0
    %74 = vmatpush1.bf16.msra.mxu0 0
    %75 = vmatprep.subr.bf16.mxu0 0
    %76 = vmatpush1.bf16.msra.mxu0 0
    %77 = vmatprep.subr.bf16.mxu0 0
    %78 = vmatpush1.bf16.msra.mxu0 0
    %79 = vmatprep.subr.bf16.mxu0 0
    %80 = vmatpush1.bf16.msra.mxu0 0
    %81 = vmatprep.subr.bf16.mxu0 0
    %82 = vmatpush1.bf16.msra.mxu0 0
    %83 = vmatprep.subr.bf16.mxu0 0
    %84 = vmatpush1.bf16.msra.mxu0 0
    %85 = vmatprep.subr.bf16.mxu0 0
    %86 = vmatpush1.bf16.msra.mxu0 0
    %87 = vmatprep.subr.bf16.mxu0 0
    %88 = vmatpush1.bf16.msra.mxu0 0
    %89 = vmatprep.subr.bf16.mxu0 0
    %90 = vmatpush1.bf16.msra.mxu0 0
    %91 = vmatprep.subr.bf16.mxu0 0
    %92 = vmatpush1.bf16.msra.mxu0 0
    %93 = vmatprep.subr.bf16.mxu0 0
    %94 = vmatpush1.bf16.msra.mxu0 0
    %95 = vmatprep.subr.bf16.mxu0 0
    %96 = vmatpush1.bf16.msra.mxu0 0
    %97 = vmatprep.subr.bf16.mxu0 0
    %98 = vmatpush1.bf16.msra.mxu0 0
    %99 = vmatprep.subr.bf16.mxu0 0
    %100 = vmatpush1.bf16.msra.mxu0 0
    %101 = vmatprep.mubr.bf16.mxu0 0
    %102 = vmatmul.mubr.bf16.gmra.mrb[0].mxu0 %v67
    %v103 = vpop.f32.mrb[0].mxu0
    %v104 = vadd.f32 %v57, %v103
    %v105 = vpop.f32.mrb[0].mxu0
    %v106 = vpop.f32.mrb[0].mxu0
    %v107 = vpop.f32.mrb[0].mxu0
    %108 = vdwg.mxu0
    %v109 = vmax.f32 %v104, 0.0
    %v110 = vpack.c.bf16 %v109, %v109
    %v111 = vld [vmem:[#allocation2] sm:$0xf]
    %v112 = vld [vmem:[#allocation2 + $0x4] sm:$0xf]
    %v113 = vld [vmem:[#allocation2 + $0x8] sm:$0xf]
    %v114 = vld [vmem:[#allocation2 + $0xc] sm:$0xf]
    %v115 = vld [vmem:[#allocation2 + $0x10] sm:$0xf]
    %v116 = vld [vmem:[#allocation2 + $0x14] sm:$0xf]
    %v117 = vld [vmem:[#allocation2 + $0x18] sm:$0xf]
    %v118 = vld [vmem:[#allocation2 + $0x1c] sm:$0xf]
    %v119 = vld [vmem:[#allocation2 + $0x20] sm:$0xf]
    %v120 = vld [vmem:[#allocation2 + $0x24] sm:$0xf]
    %v121 = vld [vmem:[#allocation2 + $0x28] sm:$0xf]
    %v122 = vld [vmem:[#allocation2 + $0x2c] sm:$0xf]
    %v123 = vld [vmem:[#allocation2 + $0x30] sm:$0xf]
    %v124 = vld [vmem:[#allocation2 + $0x34] sm:$0xf]
    %v125 = vld [vmem:[#allocation2 + $0x38] sm:$0xf]
    %v126 = vld [vmem:[#allocation2 + $0x3c] sm:$0xf]
    %v127 = vld [vmem:[%s4] sm:$0x1]
    %v129 = vlaneseq
    %v130 = vshrl.u32 %v129, 7
    %v131 = vsub.s32 0, %v130
    %v132 = vrot.slane %v127, %v131
    %v150 = vunpack.c.l.b16 %v111
    %v151 = vunpack.c.l.b16 %v112
    %v152 = vunpack.c.l.b16 %v113
    %v153 = vunpack.c.l.b16 %v114
    %v154 = vunpack.c.l.b16 %v115
    %v155 = vunpack.c.l.b16 %v116
    %v156 = vunpack.c.l.b16 %v117
    %v157 = vunpack.c.l.b16 %v118
    %v158 = vunpack.c.l.b16 %v119
    %v159 = vunpack.c.l.b16 %v120
    %v160 = vunpack.c.l.b16 %v121
    %v161 = vunpack.c.l.b16 %v122
    %v162 = vunpack.c.l.b16 %v123
    %v163 = vunpack.c.l.b16 %v124
    %v164 = vunpack.c.l.b16 %v125
    %v165 = vunpack.c.l.b16 %v126
    %v166 = vpack.c.b16 %v151, %v150
    %v167 = vpack.c.b16 %v153, %v152
    %v168 = vpack.c.b16 %v155, %v154
    %v169 = vpack.c.b16 %v157, %v156
    %v170 = vpack.c.b16 %v159, %v158
    %v171 = vpack.c.b16 %v161, %v160
    %v172 = vpack.c.b16 %v163, %v162
    %v173 = vpack.c.b16 %v165, %v164
    %182 = vmatprep.subr.bf16.mxu0 0
    %183 = vmatpush1.bf16.msra.mxu0 %v166
    %184 = vmatprep.subr.bf16.mxu0 0
    %185 = vmatpush1.bf16.msra.mxu0 %v167
    %186 = vmatprep.subr.bf16.mxu0 0
    %187 = vmatpush1.bf16.msra.mxu0 %v168
    %188 = vmatprep.subr.bf16.mxu0 0
    %189 = vmatpush1.bf16.msra.mxu0 %v169
    %190 = vmatprep.subr.bf16.mxu0 0
    %191 = vmatpush1.bf16.msra.mxu0 %v170
    %192 = vmatprep.subr.bf16.mxu0 0
    %193 = vmatpush1.bf16.msra.mxu0 %v171
    %194 = vmatprep.subr.bf16.mxu0 0
    %195 = vmatpush1.bf16.msra.mxu0 %v172
    %196 = vmatprep.subr.bf16.mxu0 0
    %197 = vmatpush1.bf16.msra.mxu0 %v173
    %198 = vmatprep.subr.bf16.mxu0 0
    %199 = vmatpush1.bf16.msra.mxu0 0
    %200 = vmatprep.subr.bf16.mxu0 0
    %201 = vmatpush1.bf16.msra.mxu0 0
    %202 = vmatprep.subr.bf16.mxu0 0
    %203 = vmatpush1.bf16.msra.mxu0 0
    %204 = vmatprep.subr.bf16.mxu0 0
    %205 = vmatpush1.bf16.msra.mxu0 0
    %206 = vmatprep.subr.bf16.mxu0 0
    %207 = vmatpush1.bf16.msra.mxu0 0
    %208 = vmatprep.subr.bf16.mxu0 0
    %209 = vmatpush1.bf16.msra.mxu0 0
    %210 = vmatprep.subr.bf16.mxu0 0
    %211 = vmatpush1.bf16.msra.mxu0 0
    %212 = vmatprep.subr.bf16.mxu0 0
    %213 = vmatpush1.bf16.msra.mxu0 0
    %214 = vmatprep.mubr.bf16.mxu0 0
    %215 = vmatmul.mubr.bf16.gmra.mrb[0].mxu0 %v110
    %v216 = vpop.f32.mrb[0].mxu0
    %v217 = vadd.f32 %v132, %v216
    %v218 = vpop.f32.mrb[0].mxu0
    %v219 = vpop.f32.mrb[0].mxu0
    %v220 = vpop.f32.mrb[0].mxu0
    %221 = vdwg.mxu0
    %v222 = vmax.f32 %v217, 0.0
    %v223 = vpack.c.bf16 %v222, %v222
    %v224 = vld [vmem:[%s5] sm:$0xff]
    %v225 = vld [vmem:[%s5 + $0x8] sm:$0xff]
    %v226 = vld [vmem:[%s5 + $0x10] sm:$0xff]
    %v227 = vld [vmem:[%s5 + $0x18] sm:$0xff]
    %v228 = vld [vmem:[%s5 + $0x20] sm:$0xff]
    %v229 = vld [vmem:[%s5 + $0x28] sm:$0xff]
    %v230 = vld [vmem:[%s5 + $0x30] sm:$0xff]
    %v231 = vld [vmem:[%s5 + $0x38] sm:$0xff]
    %v232 = vld [vmem:[%s5 + $0x40] sm:$0xff]
    %v233 = vld [vmem:[%s5 + $0x48] sm:$0xff]
    %v234 = vld [vmem:[%s5 + $0x50] sm:$0xff]
    %v235 = vld [vmem:[%s5 + $0x58] sm:$0xff]
    %v236 = vld [vmem:[%s5 + $0x60] sm:$0xff]
    %v237 = vld [vmem:[%s5 + $0x68] sm:$0xff]
    %v238 = vld [vmem:[%s5 + $0x70] sm:$0xff]
    %v239 = vld [vmem:[%s5 + $0x78] sm:$0xff]
    %v240 = vld [vmem:[%s6] sm:$0x3]
    %v242 = vlaneseq
    %v243 = vshrl.u32 %v242, 7
    %v244 = vsub.s32 0, %v243
    %v245 = vrot.slane %v240, %v244
    %v246 = vlaneseq
    %v247 = vshrl.u32 %v246, 7
    %v248 = vsub.s32 1, %v247
    %v249 = vrot.slane %v240, %v248
    %v268 = vunpack.c.l.b16 %v224
    %v269 = vunpack.c.h.b16 %v224
    %v270 = vunpack.c.l.b16 %v225
    %v271 = vunpack.c.h.b16 %v225
    %v272 = vunpack.c.l.b16 %v226
    %v273 = vunpack.c.h.b16 %v226
    %v274 = vunpack.c.l.b16 %v227
    %v275 = vunpack.c.h.b16 %v227
    %v276 = vunpack.c.l.b16 %v228
    %v277 = vunpack.c.h.b16 %v228
    %v278 = vunpack.c.l.b16 %v229
    %v279 = vunpack.c.h.b16 %v229
    %v280 = vunpack.c.l.b16 %v230
    %v281 = vunpack.c.h.b16 %v230
    %v282 = vunpack.c.l.b16 %v231
    %v283 = vunpack.c.h.b16 %v231
    %v284 = vunpack.c.l.b16 %v232
    %v285 = vunpack.c.h.b16 %v232
    %v286 = vunpack.c.l.b16 %v233
    %v287 = vunpack.c.h.b16 %v233
    %v288 = vunpack.c.l.b16 %v234
    %v289 = vunpack.c.h.b16 %v234
    %v290 = vunpack.c.l.b16 %v235
    %v291 = vunpack.c.h.b16 %v235
    %v292 = vunpack.c.l.b16 %v236
    %v293 = vunpack.c.h.b16 %v236
    %v294 = vunpack.c.l.b16 %v237
    %v295 = vunpack.c.h.b16 %v237
    %v296 = vunpack.c.l.b16 %v238
    %v297 = vunpack.c.h.b16 %v238
    %v298 = vunpack.c.l.b16 %v239
    %v299 = vunpack.c.h.b16 %v239
    %v300 = vpack.c.b16 %v270, %v268
    %v301 = vpack.c.b16 %v271, %v269
    %v302 = vpack.c.b16 %v274, %v272
    %v303 = vpack.c.b16 %v275, %v273
    %v304 = vpack.c.b16 %v278, %v276
    %v305 = vpack.c.b16 %v279, %v277
    %v306 = vpack.c.b16 %v282, %v280
    %v307 = vpack.c.b16 %v283, %v281
    %v308 = vpack.c.b16 %v286, %v284
    %v309 = vpack.c.b16 %v287, %v285
    %v310 = vpack.c.b16 %v290, %v288
    %v311 = vpack.c.b16 %v291, %v289
    %v312 = vpack.c.b16 %v294, %v292
    %v313 = vpack.c.b16 %v295, %v293
    %v314 = vpack.c.b16 %v298, %v296
    %v315 = vpack.c.b16 %v299, %v297
    %332 = vmatprep.subr.bf16.mxu0 %v301
    %333 = vmatpush1.bf16.msra.mxu0 %v300
    %334 = vmatprep.subr.bf16.mxu0 %v303
    %335 = vmatpush1.bf16.msra.mxu0 %v302
    %336 = vmatprep.subr.bf16.mxu0 %v305
    %337 = vmatpush1.bf16.msra.mxu0 %v304
    %338 = vmatprep.subr.bf16.mxu0 %v307
    %339 = vmatpush1.bf16.msra.mxu0 %v306
    %340 = vmatprep.subr.bf16.mxu0 %v309
    %341 = vmatpush1.bf16.msra.mxu0 %v308
    %342 = vmatprep.subr.bf16.mxu0 %v311
    %343 = vmatpush1.bf16.msra.mxu0 %v310
    %344 = vmatprep.subr.bf16.mxu0 %v313
    %345 = vmatpush1.bf16.msra.mxu0 %v312
    %346 = vmatprep.subr.bf16.mxu0 %v315
    %347 = vmatpush1.bf16.msra.mxu0 %v314
    %348 = vmatprep.subr.bf16.mxu0 0
    %349 = vmatpush1.bf16.msra.mxu0 0
    %350 = vmatprep.subr.bf16.mxu0 0
    %351 = vmatpush1.bf16.msra.mxu0 0
    %352 = vmatprep.subr.bf16.mxu0 0
    %353 = vmatpush1.bf16.msra.mxu0 0
    %354 = vmatprep.subr.bf16.mxu0 0
    %355 = vmatpush1.bf16.msra.mxu0 0
    %356 = vmatprep.subr.bf16.mxu0 0
    %357 = vmatpush1.bf16.msra.mxu0 0
    %358 = vmatprep.subr.bf16.mxu0 0
    %359 = vmatpush1.bf16.msra.mxu0 0
    %360 = vmatprep.subr.bf16.mxu0 0
    %361 = vmatpush1.bf16.msra.mxu0 0
    %362 = vmatprep.subr.bf16.mxu0 0
    %363 = vmatpush1.bf16.msra.mxu0 0
    %364 = vmatprep.mubr.bf16.mxu0 0
    %365 = vmatmul.mubr.bf16.gmra.mrb[0].mxu0 %v223
    %v366 = vpop.f32.mrb[0].mxu0
    %v367 = vadd.f32 %v245, %v366
    %v368 = vpop.f32.mrb[0].mxu0
    %v369 = vadd.f32 %v249, %v368
    %v370 = vpop.f32.mrb[0].mxu0
    %v371 = vpop.f32.mrb[0].mxu0
    %372 = vdwg.mxu0
    %v373 = vmax.f32 %v367, 0.0
    %v374 = vmax.f32 %v369, 0.0
    %v375 = vpack.c.bf16 %v373, %v373
    %v376 = vpack.c.bf16 %v374, %v374
    %v377 = vld [vmem:[%s7] sm:$0xf]
    %v378 = vld [vmem:[%s7 + $0x4] sm:$0xf]
    %v379 = vld [vmem:[%s7 + $0x8] sm:$0xf]
    %v380 = vld [vmem:[%s7 + $0xc] sm:$0xf]
    %v381 = vld [vmem:[%s7 + $0x10] sm:$0xf]
    %v382 = vld [vmem:[%s7 + $0x14] sm:$0xf]
    %v383 = vld [vmem:[%s7 + $0x18] sm:$0xf]
    %v384 = vld [vmem:[%s7 + $0x1c] sm:$0xf]
    %v385 = vld [vmem:[%s7 + $0x20] sm:$0xf]
    %v386 = vld [vmem:[%s7 + $0x24] sm:$0xf]
    %v387 = vld [vmem:[%s7 + $0x28] sm:$0xf]
    %v388 = vld [vmem:[%s7 + $0x2c] sm:$0xf]
    %v389 = vld [vmem:[%s7 + $0x30] sm:$0xf]
    %v390 = vld [vmem:[%s7 + $0x34] sm:$0xf]
    %v391 = vld [vmem:[%s7 + $0x38] sm:$0xf]
    %v392 = vld [vmem:[%s7 + $0x3c] sm:$0xf]
    %v393 = vld [vmem:[%s7 + $0x40] sm:$0xf]
    %v394 = vld [vmem:[%s7 + $0x44] sm:$0xf]
    %v395 = vld [vmem:[%s7 + $0x48] sm:$0xf]
    %v396 = vld [vmem:[%s7 + $0x4c] sm:$0xf]
    %v397 = vld [vmem:[%s7 + $0x50] sm:$0xf]
    %v398 = vld [vmem:[%s7 + $0x54] sm:$0xf]
    %v399 = vld [vmem:[%s7 + $0x58] sm:$0xf]
    %v400 = vld [vmem:[%s7 + $0x5c] sm:$0xf]
    %v401 = vld [vmem:[%s7 + $0x60] sm:$0xf]
    %v402 = vld [vmem:[%s7 + $0x64] sm:$0xf]
    %v403 = vld [vmem:[%s7 + $0x68] sm:$0xf]
    %v404 = vld [vmem:[%s7 + $0x6c] sm:$0xf]
    %v405 = vld [vmem:[%s7 + $0x70] sm:$0xf]
    %v406 = vld [vmem:[%s7 + $0x74] sm:$0xf]
    %v407 = vld [vmem:[%s7 + $0x78] sm:$0xf]
    %v408 = vld [vmem:[%s7 + $0x7c] sm:$0xf]
    %v409 = vld [vmem:[%s8] sm:$0x1]
    %v411 = vlaneseq
    %v412 = vshrl.u32 %v411, 7
    %v413 = vsub.s32 0, %v412
    %v414 = vrot.slane %v409, %v413
    %v448 = vunpack.c.l.b16 %v377
    %v449 = vunpack.c.l.b16 %v378
    %v450 = vunpack.c.l.b16 %v379
    %v451 = vunpack.c.l.b16 %v380
    %v452 = vunpack.c.l.b16 %v381
    %v453 = vunpack.c.l.b16 %v382
    %v454 = vunpack.c.l.b16 %v383
    %v455 = vunpack.c.l.b16 %v384
    %v456 = vunpack.c.l.b16 %v385
    %v457 = vunpack.c.l.b16 %v386
    %v458 = vunpack.c.l.b16 %v387
    %v459 = vunpack.c.l.b16 %v388
    %v460 = vunpack.c.l.b16 %v389
    %v461 = vunpack.c.l.b16 %v390
    %v462 = vunpack.c.l.b16 %v391
    %v463 = vunpack.c.l.b16 %v392
    %v464 = vunpack.c.l.b16 %v393
    %v465 = vunpack.c.l.b16 %v394
    %v466 = vunpack.c.l.b16 %v395
    %v467 = vunpack.c.l.b16 %v396
    %v468 = vunpack.c.l.b16 %v397
    %v469 = vunpack.c.l.b16 %v398
    %v470 = vunpack.c.l.b16 %v399
    %v471 = vunpack.c.l.b16 %v400
    %v472 = vunpack.c.l.b16 %v401
    %v473 = vunpack.c.l.b16 %v402
    %v474 = vunpack.c.l.b16 %v403
    %v475 = vunpack.c.l.b16 %v404
    %v476 = vunpack.c.l.b16 %v405
    %v477 = vunpack.c.l.b16 %v406
    %v478 = vunpack.c.l.b16 %v407
    %v479 = vunpack.c.l.b16 %v408
    %v480 = vpack.c.b16 %v449, %v448
    %v481 = vpack.c.b16 %v451, %v450
    %v482 = vpack.c.b16 %v453, %v452
    %v483 = vpack.c.b16 %v455, %v454
    %v484 = vpack.c.b16 %v457, %v456
    %v485 = vpack.c.b16 %v459, %v458
    %v486 = vpack.c.b16 %v461, %v460
    %v487 = vpack.c.b16 %v463, %v462
    %v488 = vpack.c.b16 %v465, %v464
    %v489 = vpack.c.b16 %v467, %v466
    %v490 = vpack.c.b16 %v469, %v468
    %v491 = vpack.c.b16 %v471, %v470
    %v492 = vpack.c.b16 %v473, %v472
    %v493 = vpack.c.b16 %v475, %v474
    %v494 = vpack.c.b16 %v477, %v476
    %v495 = vpack.c.b16 %v479, %v478
    %512 = vmatprep.subr.bf16.mxu0 0
    %513 = vmatpush1.bf16.msra.mxu0 %v480
    %514 = vmatprep.subr.bf16.mxu0 0
    %515 = vmatpush1.bf16.msra.mxu0 %v481
    %516 = vmatprep.subr.bf16.mxu0 0
    %517 = vmatpush1.bf16.msra.mxu0 %v482
    %518 = vmatprep.subr.bf16.mxu0 0
    %519 = vmatpush1.bf16.msra.mxu0 %v483
    %520 = vmatprep.subr.bf16.mxu0 0
    %521 = vmatpush1.bf16.msra.mxu0 %v484
    %522 = vmatprep.subr.bf16.mxu0 0
    %523 = vmatpush1.bf16.msra.mxu0 %v485
    %524 = vmatprep.subr.bf16.mxu0 0
    %525 = vmatpush1.bf16.msra.mxu0 %v486
    %526 = vmatprep.subr.bf16.mxu0 0
    %527 = vmatpush1.bf16.msra.mxu0 %v487
    %528 = vmatprep.subr.bf16.mxu0 0
    %529 = vmatpush1.bf16.msra.mxu0 %v488
    %530 = vmatprep.subr.bf16.mxu0 0
    %531 = vmatpush1.bf16.msra.mxu0 %v489
    %532 = vmatprep.subr.bf16.mxu0 0
    %533 = vmatpush1.bf16.msra.mxu0 %v490
    %534 = vmatprep.subr.bf16.mxu0 0
    %535 = vmatpush1.bf16.msra.mxu0 %v491
    %536 = vmatprep.subr.bf16.mxu0 0
    %537 = vmatpush1.bf16.msra.mxu0 %v492
    %538 = vmatprep.subr.bf16.mxu0 0
    %539 = vmatpush1.bf16.msra.mxu0 %v493
    %540 = vmatprep.subr.bf16.mxu0 0
    %541 = vmatpush1.bf16.msra.mxu0 %v494
    %542 = vmatprep.subr.bf16.mxu0 0
    %543 = vmatpush1.bf16.msra.mxu0 %v495
    %544 = vmatprep.mubr.bf16.mxu0 %v376
    %545 = vmatmul.mubr.bf16.gmra.mrb[0].mxu0 %v375
    %v546 = vpop.f32.mrb[0].mxu0
    %v547 = vadd.f32 %v414, %v546
    %v548 = vpop.f32.mrb[0].mxu0
    %v549 = vpop.f32.mrb[0].mxu0
    %v550 = vpop.f32.mrb[0].mxu0
    %551 = vdwg.mxu0
    %vm552 = vcmask 58368
    %553 = vst.msk [vmem:[#allocation5] sm:$0x3] %vm552, %v547
    // Predicated region
    $region42: #{actor_cont_forward.1} parent=1 // pred_check
      _
    $region43: #{actor_cont_forward.1} parent=1 // pred_check_branch
      %555 = sbr.rel (0) target = $region45
    $region44: #{actor_cont_forward.1} parent=1 // pred_region
      %s557 = ssub.s32 32, 32
      %558 = vsyncadd [#allocation4], %s557
      %s560 = sshll.u32 [#allocation5], 4
      %s561 = int_to_ptr.vmem [resolvable:$true] %s560
      %563 = dma.vmem_to_hbm [thread:$0]  %s561, 32, %s9, [#allocation4]
    $region45: #{actor_cont_forward.1} parent=1 // pred_fallthru
      _
    // Predicated region
    $region46: #{actor_cont_forward.1} parent=1 // pred_check
      _
    $region47: #{actor_cont_forward.1} parent=1 // pred_check_branch
      %565 = sbr.rel (0) target = $region49
    $region48: #{actor_cont_forward.1} parent=1 // pred_region
      %566 = dma.done [#allocation4], 32
    $region49: #{actor_cont_forward.1} parent=1 // pred_fallthru
      _
    %567 = vsyncpa [#allocation3], 1
    %568 = vsyncpa [#allocation4], 1

</llo_original>
